<compile_context>
chip_gen: v7x
topology: tpu7x:2x2x1
jax: 0.10.0
libtpu: 0.0.40
codegen_flags: <defaults>
</compile_context>

<pallas_src>
import jax
import jax.numpy as jnp
from jax.experimental import pallas as pl
from jax.experimental.pallas import tpu as pltpu


OUT_W = 128  # lane-dense packed output width (one full vreg lane span)


def _round_up(x, m):
    return ((x + m - 1) // m) * m


def vpg_forward_kernel(x_ref, w1_ref, b1_ref, wh_ref, bh_ref, u_ref, out_ref):
    # ---- shared body: hidden = tanh(x @ W1 + b1) ------------------------
    x = x_ref[...]                                              # (TB, D) f32
    h = jnp.tanh(
        jnp.dot(x, w1_ref[...], preferred_element_type=jnp.float32)
        + b1_ref[...]                                           # (1, H) bcast
    )                                                           # (TB, H)

    # ---- fused policy+value head: one MXU push --------------------------
    heads = (jnp.dot(h, wh_ref[...], preferred_element_type=jnp.float32)
             + bh_ref[...])                                     # (TB, A+1)
    num_actions = heads.shape[-1] - 1
    logits = heads[:, :num_actions]                             # (TB, A)
    value = heads[:, num_actions:num_actions + 1]               # (TB, 1)

    # ---- log-softmax pieces (no full log_probs materialization) ---------
    m = jnp.max(logits, axis=-1, keepdims=True)
    z = logits - m
    lse = jnp.log(jnp.sum(jnp.exp(z), axis=-1, keepdims=True))  # (TB, 1)

    # ---- categorical sample via Gumbel-max -------------------------------
    u = u_ref[...]                                              # (TB, A) in (0,1)
    gumbel = -jnp.log(-jnp.log(u))
    scores = logits + gumbel

    # argmax along the action axis via iota+min (first max, Mosaic-friendly)
    max_s = jnp.max(scores, axis=-1, keepdims=True)
    col = jax.lax.broadcasted_iota(jnp.int32, scores.shape, 1)
    candidate = jnp.where(scores >= max_s, col, num_actions)
    action = jnp.min(candidate, axis=-1, keepdims=True)         # (TB, 1) int32

    # ---- log_prob of the sampled action (one-hot gather, no full array) --
    onehot = (col == action).astype(jnp.float32)                # (TB, A)
    logp = jnp.sum(z * onehot, axis=-1, keepdims=True) - lse    # (TB, 1)

    # ---- pack lane-dense output slab -------------------------------------
    # col 0 = log_prob, col 1 = value, col 2 = action (small int, exact in f32)
    ocol = jax.lax.broadcasted_iota(jnp.int32, (x.shape[0], OUT_W), 1)
    act_f = action.astype(jnp.float32)
    packed = jnp.where(ocol == 0, logp,
             jnp.where(ocol == 1, value,
             jnp.where(ocol == 2, act_f, 0.0)))
    out_ref[...] = packed


def vpg_forward(state, params, uniform_noise, *, tile_b=512):
    """Fused VGP.forward.

    Returns (action[B] int32, log_prob[B] f32, value[B, 1] f32), matching the
    PyTorch forward's (action, log_prob, value) semantics.
    """
    w1, b1, wh, bh = params
    B, D = state.shape
    A = wh.shape[1] - 1

    # Batch tile: multiple of 8 sublanes, no larger than (padded) batch.
    tile_b = min(tile_b, _round_up(B, 8))
    Bp = _round_up(B, tile_b)
    if Bp != B:
        state = jnp.pad(state, ((0, Bp - B), (0, 0)))
        # keep padded noise strictly inside (0,1) so -log(-log(u)) is finite
        uniform_noise = jnp.pad(uniform_noise, ((0, Bp - B), (0, 0)),
                                constant_values=0.5)

    grid = (Bp // tile_b,)

    packed = pl.pallas_call(
        vpg_forward_kernel,
        out_shape=jax.ShapeDtypeStruct((Bp, OUT_W), jnp.float32),
        grid=grid,
        in_specs=[
            pl.BlockSpec((tile_b, D), lambda i: (i, 0)),    # state tile
            pl.BlockSpec(w1.shape, lambda i: (0, 0)),       # weights stay
            pl.BlockSpec(b1.shape, lambda i: (0, 0)),       #   VMEM-resident
            pl.BlockSpec(wh.shape, lambda i: (0, 0)),       #   across the grid
            pl.BlockSpec(bh.shape, lambda i: (0, 0)),
            pl.BlockSpec((tile_b, A), lambda i: (i, 0)),    # noise tile
        ],
        out_specs=pl.BlockSpec((tile_b, OUT_W), lambda i: (i, 0)),
        compiler_params=pltpu.CompilerParams(
            dimension_semantics=("parallel",),          # shard batch on v7x TCs
            vmem_limit_bytes=32 * 1024 * 1024,          # explicit (v7x-safe)
        ),
    )(state, w1, b1, wh, bh, uniform_noise)

    packed = packed[:B]
    log_prob = packed[:, 0]
    value = packed[:, 1:2]
    action = packed[:, 2].astype(jnp.int32)
    return action, log_prob, value


def init_params(key, in_dim, hidden, n_actions):
    k1, k2, k3 = jax.random.split(key, 3)
    w1 = jax.random.normal(k1, (in_dim, hidden), jnp.float32) * 0.1
    b1 = jnp.zeros((1, hidden), jnp.float32)
    wp = jax.random.normal(k2, (hidden, n_actions), jnp.float32) * 0.1
    wv = jax.random.normal(k3, (hidden, 1), jnp.float32) * 0.1
    # fused policy + value head: (H, A+1) weight, (1, A+1) bias
    wh = jnp.concatenate([wp, wv], axis=1)
    bh = jnp.zeros((1, n_actions + 1), jnp.float32)
    return (w1, b1, wh, bh)


if __name__ == "__main__":
    B, D, H, A = 8, 16, 32, 8

    key = jax.random.PRNGKey(0)
    k_state, k_params, k_noise = jax.random.split(key, 3)

    state = jax.random.normal(k_state, (B, D), jnp.float32)
    params = init_params(k_params, D, H, A)
    # RNG glue for Categorical sampling (Gumbel-max uses uniform noise); kept
    # strictly inside (0, 1) so -log(-log(u)) is finite.
    # TODO(synk): could move noise generation in-kernel via pltpu.prng_seed +
    # pltpu.prng_random_bits to drop one input DMA; kept external for
    # deterministic, clamped noise.
    uniform_noise = jax.random.uniform(
        k_noise, (B, A), jnp.float32, minval=1e-6, maxval=1.0 - 1e-6)

    action, log_prob, value = vpg_forward(state, params, uniform_noise)
    jax.block_until_ready((action, log_prob, value))

    assert action.shape == (B,) and action.dtype == jnp.int32
    assert log_prob.shape == (B,) and log_prob.dtype == jnp.float32
    assert value.shape == (B, 1) and value.dtype == jnp.float32
    assert bool(jnp.all(action >= 0)) and bool(jnp.all(action < A))
    assert bool(jnp.all(log_prob <= 0.0))

    print("KERNEL_OK")
</pallas_src>

<mosaic_0001>
module attributes {stable_mosaic.version = 11 : i64} {
  func.func @vpg_forward_kernel(%arg0: i32, %arg1: memref<8x16xf32, #tpu.memory_space<vmem>>, %arg2: memref<16x32xf32, #tpu.memory_space<vmem>>, %arg3: memref<1x32xf32, #tpu.memory_space<vmem>>, %arg4: memref<32x9xf32, #tpu.memory_space<vmem>>, %arg5: memref<1x9xf32, #tpu.memory_space<vmem>>, %arg6: memref<8x8xf32, #tpu.memory_space<vmem>>, %arg7: memref<8x128xf32, #tpu.memory_space<vmem>>) attributes {dimension_semantics = [#tpu.dimension_semantics<parallel>], iteration_bounds = array<i64: 1>, scalar_prefetch = 0 : i64, scratch_operands = 0 : i64, tpu.core_type = #tpu.core_type<tc>, window_params = [{transform_indices = @transform_0, window_bounds = array<i64: 8, 16>}, {pipeline_mode = #tpu.pipeline_mode<synchronous>, transform_indices = @transform_1, window_bounds = array<i64: 16, 32>}, {pipeline_mode = #tpu.pipeline_mode<synchronous>, transform_indices = @transform_2, window_bounds = array<i64: 1, 32>}, {pipeline_mode = #tpu.pipeline_mode<synchronous>, transform_indices = @transform_3, window_bounds = array<i64: 32, 9>}, {pipeline_mode = #tpu.pipeline_mode<synchronous>, transform_indices = @transform_4, window_bounds = array<i64: 1, 9>}, {transform_indices = @transform_5, window_bounds = array<i64: 8, 8>}, {transform_indices = @transform_6, window_bounds = array<i64: 8, 128>}]} {
    %c0 = arith.constant 0 : index
    %c0_0 = arith.constant 0 : index
    %0 = vector.load %arg1[%c0, %c0_0] : memref<8x16xf32, #tpu.memory_space<vmem>>, vector<8x16xf32>
    %c0_1 = arith.constant 0 : index
    %c0_2 = arith.constant 0 : index
    %1 = vector.load %arg2[%c0_1, %c0_2] : memref<16x32xf32, #tpu.memory_space<vmem>>, vector<16x32xf32>
    %cst = arith.constant dense<0.000000e+00> : vector<8x32xf32>
    %2 = tpu.matmul %0, %1, %cst {dimension_numbers = #tpu.dot_dimension_numbers<[1], [0], [0], [1], [0, 0, 1, 1], [], []>} : vector<8x16xf32>, vector<16x32xf32>, vector<8x32xf32> -> vector<8x32xf32>
    %c0_3 = arith.constant 0 : index
    %c0_4 = arith.constant 0 : index
    %3 = vector.load %arg3[%c0_3, %c0_4] : memref<1x32xf32, #tpu.memory_space<vmem>>, vector<1x32xf32>
    %4 = vector.broadcast %3 : vector<1x32xf32> to vector<8x32xf32>
    %5 = arith.addf %2, %4 : vector<8x32xf32>
    %6 = math.tanh %5 : vector<8x32xf32>
    %c0_5 = arith.constant 0 : index
    %c0_6 = arith.constant 0 : index
    %7 = vector.load %arg4[%c0_5, %c0_6] : memref<32x9xf32, #tpu.memory_space<vmem>>, vector<32x9xf32>
    %cst_7 = arith.constant dense<0.000000e+00> : vector<8x9xf32>
    %8 = tpu.matmul %6, %7, %cst_7 {dimension_numbers = #tpu.dot_dimension_numbers<[1], [0], [0], [1], [0, 0, 1, 1], [], []>} : vector<8x32xf32>, vector<32x9xf32>, vector<8x9xf32> -> vector<8x9xf32>
    %c0_8 = arith.constant 0 : index
    %c0_9 = arith.constant 0 : index
    %9 = vector.load %arg5[%c0_8, %c0_9] : memref<1x9xf32, #tpu.memory_space<vmem>>, vector<1x9xf32>
    %10 = vector.broadcast %9 : vector<1x9xf32> to vector<8x9xf32>
    %11 = arith.addf %8, %10 : vector<8x9xf32>
    %12 = vector.extract_strided_slice %11 {offsets = [0, 0], sizes = [8, 8], strides = [1, 1]} : vector<8x9xf32> to vector<8x8xf32>
    %13 = vector.extract_strided_slice %11 {offsets = [0, 8], sizes = [8, 1], strides = [1, 1]} : vector<8x9xf32> to vector<8x1xf32>
    %cst_10 = arith.constant dense<0xFF800000> : vector<8xf32>
    %14 = vector.multi_reduction <maximumf>, %12, %cst_10 [1] : vector<8x8xf32> to vector<8xf32>
    %15 = vector.shape_cast %14 : vector<8xf32> to vector<8x1xf32>
    %16 = vector.broadcast %15 : vector<8x1xf32> to vector<8x8xf32>
    %17 = arith.subf %12, %16 : vector<8x8xf32>
    %18 = math.exp %17 : vector<8x8xf32>
    %cst_11 = arith.constant dense<0.000000e+00> : vector<8xf32>
    %19 = vector.multi_reduction <add>, %18, %cst_11 [1] : vector<8x8xf32> to vector<8xf32>
    %20 = vector.shape_cast %19 : vector<8xf32> to vector<8x1xf32>
    %21 = math.log %20 : vector<8x1xf32>
    %c0_12 = arith.constant 0 : index
    %c0_13 = arith.constant 0 : index
    %22 = vector.load %arg6[%c0_12, %c0_13] : memref<8x8xf32, #tpu.memory_space<vmem>>, vector<8x8xf32>
    %23 = math.log %22 : vector<8x8xf32>
    %cst_14 = arith.constant 0.000000e+00 : f32
    %24 = vector.broadcast %cst_14 : f32 to vector<8x8xf32>
    %25 = arith.subf %24, %23 : vector<8x8xf32>
    %26 = math.log %25 : vector<8x8xf32>
    %cst_15 = arith.constant 0.000000e+00 : f32
    %27 = vector.broadcast %cst_15 : f32 to vector<8x8xf32>
    %28 = arith.subf %27, %26 : vector<8x8xf32>
    %29 = arith.addf %12, %28 : vector<8x8xf32>
    %cst_16 = arith.constant dense<0xFF800000> : vector<8xf32>
    %30 = vector.multi_reduction <maximumf>, %29, %cst_16 [1] : vector<8x8xf32> to vector<8xf32>
    %31 = vector.shape_cast %30 : vector<8xf32> to vector<8x1xf32>
    %32 = tpu.iota {dimensions = array<i32: 1>} : vector<8x8xi32>
    %33 = vector.broadcast %31 : vector<8x1xf32> to vector<8x8xf32>
    %34 = arith.cmpf oge, %29, %33 : vector<8x8xf32>
    %c8_i32 = arith.constant 8 : i32
    %35 = vector.broadcast %c8_i32 : i32 to vector<8x8xi32>
    %36 = arith.select %34, %32, %35 : vector<8x8xi1>, vector<8x8xi32>
    %cst_17 = arith.constant dense<2147483647> : vector<8xi32>
    %37 = vector.multi_reduction <minsi>, %36, %cst_17 [1] : vector<8x8xi32> to vector<8xi32>
    %38 = vector.shape_cast %37 : vector<8xi32> to vector<8x1xi32>
    %39 = vector.broadcast %38 : vector<8x1xi32> to vector<8x8xi32>
    %40 = arith.cmpi eq, %32, %39 : vector<8x8xi32>
    %41 = arith.extui %40 : vector<8x8xi1> to vector<8x8xi32>
    %42 = arith.sitofp %41 : vector<8x8xi32> to vector<8x8xf32>
    %43 = arith.mulf %17, %42 : vector<8x8xf32>
    %cst_18 = arith.constant dense<0.000000e+00> : vector<8xf32>
    %44 = vector.multi_reduction <add>, %43, %cst_18 [1] : vector<8x8xf32> to vector<8xf32>
    %45 = vector.shape_cast %44 : vector<8xf32> to vector<8x1xf32>
    %46 = arith.subf %45, %21 : vector<8x1xf32>
    %47 = tpu.iota {dimensions = array<i32: 1>} : vector<8x128xi32>
    %48 = arith.sitofp %38 : vector<8x1xi32> to vector<8x1xf32>
    %c0_i32 = arith.constant 0 : i32
    %49 = vector.broadcast %c0_i32 : i32 to vector<8x128xi32>
    %50 = arith.cmpi eq, %47, %49 : vector<8x128xi32>
    %c1_i32 = arith.constant 1 : i32
    %51 = vector.broadcast %c1_i32 : i32 to vector<8x128xi32>
    %52 = arith.cmpi eq, %47, %51 : vector<8x128xi32>
    %c2_i32 = arith.constant 2 : i32
    %53 = vector.broadcast %c2_i32 : i32 to vector<8x128xi32>
    %54 = arith.cmpi eq, %47, %53 : vector<8x128xi32>
    %cst_19 = arith.constant 0.000000e+00 : f32
    %55 = vector.shape_cast %48 : vector<8x1xf32> to vector<8x1xf32>
    %56 = vector.broadcast %55 : vector<8x1xf32> to vector<8x128xf32>
    %57 = vector.broadcast %cst_19 : f32 to vector<8x128xf32>
    %58 = arith.select %54, %56, %57 : vector<8x128xi1>, vector<8x128xf32>
    %59 = vector.shape_cast %13 : vector<8x1xf32> to vector<8x1xf32>
    %60 = vector.broadcast %59 : vector<8x1xf32> to vector<8x128xf32>
    %61 = arith.select %52, %60, %58 : vector<8x128xi1>, vector<8x128xf32>
    %62 = vector.shape_cast %46 : vector<8x1xf32> to vector<8x1xf32>
    %63 = vector.broadcast %62 : vector<8x1xf32> to vector<8x128xf32>
    %64 = arith.select %50, %63, %61 : vector<8x128xi1>, vector<8x128xf32>
    %c0_20 = arith.constant 0 : index
    %c0_21 = arith.constant 0 : index
    %65 = vector.load %arg7[%c0_20, %c0_21] : memref<8x128xf32, #tpu.memory_space<vmem>>, vector<8x128xf32>
    tpu.vector_store %arg7[%c0_20, %c0_21], %64 {strides = array<i32>} : memref<8x128xf32, #tpu.memory_space<vmem>>, vector<8x128xf32>,
    return
  }
  func.func @transform_0(%arg0: i32) -> (i32, i32) {
    %c0_i32 = arith.constant 0 : i32
    %c0_i32_0 = arith.constant 0 : i32
    return %arg0, %c0_i32 : i32, i32
  }
  func.func @transform_1(%arg0: i32) -> (i32, i32) {
    %c0_i32 = arith.constant 0 : i32
    %c0_i32_0 = arith.constant 0 : i32
    %c0_i32_1 = arith.constant 0 : i32
    return %c0_i32, %c0_i32_0 : i32, i32
  }
  func.func @transform_2(%arg0: i32) -> (i32, i32) {
    %c0_i32 = arith.constant 0 : i32
    %c0_i32_0 = arith.constant 0 : i32
    %c0_i32_1 = arith.constant 0 : i32
    return %c0_i32, %c0_i32_0 : i32, i32
  }
  func.func @transform_3(%arg0: i32) -> (i32, i32) {
    %c0_i32 = arith.constant 0 : i32
    %c0_i32_0 = arith.constant 0 : i32
    %c0_i32_1 = arith.constant 0 : i32
    return %c0_i32, %c0_i32_0 : i32, i32
  }
  func.func @transform_4(%arg0: i32) -> (i32, i32) {
    %c0_i32 = arith.constant 0 : i32
    %c0_i32_0 = arith.constant 0 : i32
    %c0_i32_1 = arith.constant 0 : i32
    return %c0_i32, %c0_i32_0 : i32, i32
  }
  func.func @transform_5(%arg0: i32) -> (i32, i32) {
    %c0_i32 = arith.constant 0 : i32
    %c0_i32_0 = arith.constant 0 : i32
    return %arg0, %c0_i32 : i32, i32
  }
  func.func @transform_6(%arg0: i32) -> (i32, i32) {
    %c0_i32 = arith.constant 0 : i32
    %c0_i32_0 = arith.constant 0 : i32
    return %arg0, %c0_i32 : i32, i32
  }
}

</mosaic_0001>

<llo_original>
// kernel: tpu_custom_call.1
$region0: #{tpu_custom_call.1}
  #allocation0 [shape = 'u32[]', space=smem, size = 0x4, offset = 0x4, fixed_abs, tag = 'smem constant byte address 0x4 - core index']
  #allocation1 [shape = 'u32[144,128]{1,0:T(1,128)}', space=vmem, size = 0x12000, scoped, tag = 'internal scratch']
  %s0 = inlined_call_operand.vmem [shape: f32[8,16], index: 0, kind: input, shape index: {}]
  %s1 = inlined_call_operand.vmem [shape: f32[16,32], index: 1, kind: input, shape index: {}]
  %s2 = inlined_call_operand.vmem [shape: f32[1,32], index: 2, kind: input, shape index: {}]
  %s3 = inlined_call_operand.vmem [shape: f32[32,9], index: 3, kind: input, shape index: {}]
  %s4 = inlined_call_operand.vmem [shape: f32[1,9], index: 4, kind: input, shape index: {}]
  %s5 = inlined_call_operand.vmem [shape: f32[8,8], index: 5, kind: input, shape index: {}]
  %s6 = inlined_call_operand.hbm [shape: f32[8,128], index: 6, kind: output, shape index: {}]
  %s7 = sld [smem:[#allocation0]]
  $region34: #{tpu_custom_call.1} parent=0
    _
  %s9 = ssub.s32 1, %s7
  %s10 = scalar_select 0, %s9, %s7
  $region1: #{tpu_custom_call.1} parent=0
    #allocation2 [shape = 'u8[4096]{0}', space=vmem, size = 0x1000, scoped, tag = 'output window, operand 0, single buffered']
    #allocation3 [shape = 's32[1]{0}', space=sflag, size = 0x4, scoped, tag = 'scoped memory for tpu_custom_call.1']
    %11 = vsyncpa [#allocation3], 0
    // Predicated region
    $region2: #{tpu_custom_call.1} parent=1 // pred_check
      _
    $region3: #{tpu_custom_call.1} parent=1 // pred_check_branch
      %13 = sbr.rel (0) target = $region5
    $region4: #{tpu_custom_call.1} parent=1 // pred_region
      _
    $region5: #{tpu_custom_call.1} parent=1 // pred_fallthru
      _
    // Predicated region
    $region6: #{tpu_custom_call.1} parent=1 // pred_check
      _
    $region7: #{tpu_custom_call.1} parent=1 // pred_check_branch
      %15 = sbr.rel (0) target = $region9
    $region8: #{tpu_custom_call.1} parent=1 // pred_region
      _
    $region9: #{tpu_custom_call.1} parent=1 // pred_fallthru
      _
    // Predicated region
    $region10: #{tpu_custom_call.1} parent=1 // pred_check
      _
    $region11: #{tpu_custom_call.1} parent=1 // pred_check_branch
      %17 = sbr.rel (0) target = $region13
    $region12: #{tpu_custom_call.1} parent=1 // pred_region
      _
    $region13: #{tpu_custom_call.1} parent=1 // pred_fallthru
      _
    // Predicated region
    $region14: #{tpu_custom_call.1} parent=1 // pred_check
      _
    $region15: #{tpu_custom_call.1} parent=1 // pred_check_branch
      %19 = sbr.rel (0) target = $region17
    $region16: #{tpu_custom_call.1} parent=1 // pred_region
      _
    $region17: #{tpu_custom_call.1} parent=1 // pred_fallthru
      _
    // Predicated region
    $region18: #{tpu_custom_call.1} parent=1 // pred_check
      _
    $region19: #{tpu_custom_call.1} parent=1 // pred_check_branch
      %21 = sbr.rel (0) target = $region21
    $region20: #{tpu_custom_call.1} parent=1 // pred_region
      _
    $region21: #{tpu_custom_call.1} parent=1 // pred_fallthru
      _
    // Predicated region
    $region22: #{tpu_custom_call.1} parent=1 // pred_check
      _
    $region23: #{tpu_custom_call.1} parent=1 // pred_check_branch
      %23 = sbr.rel (0) target = $region25
    $region24: #{tpu_custom_call.1} parent=1 // pred_region
      _
    $region25: #{tpu_custom_call.1} parent=1 // pred_fallthru
      _
    %v24 = vld [vmem:[%s0] sm:$0xff]
    %v25 = vld [vmem:[%s1] sm:$0xff]
    %v26 = vld [vmem:[%s1 + $0x8] sm:$0xff]
    %v27 = vld [vmem:[%s2] sm:$0x1]
    %v29 = vlaneseq
    %v30 = vshrl.u32 %v29, 7
    %v31 = vsub.s32 0, %v30
    %v32 = vrot.slane %v27, %v31
    %vm34 = vcmask 130048
    %v36 = vsel %vm34, %v24, 0
    %38 = vmatprep.subr.mxu0 0.0
    %39 = vmatpush1.msra.mxu0 %v25
    %40 = vmatprep.subr.mxu0 0.0
    %41 = vmatpush1.msra.mxu0 %v26
    %42 = vmatprep.subr.mxu0 0.0
    %43 = vmatpush1.msra.mxu0 0.0
    %44 = vmatprep.subr.mxu0 0.0
    %45 = vmatpush1.msra.mxu0 0.0
    %46 = vmatprep.subr.mxu0 0.0
    %47 = vmatpush1.msra.mxu0 0.0
    %48 = vmatprep.subr.mxu0 0.0
    %49 = vmatpush1.msra.mxu0 0.0
    %50 = vmatprep.subr.mxu0 0.0
    %51 = vmatpush1.msra.mxu0 0.0
    %52 = vmatprep.subr.mxu0 0.0
    %53 = vmatpush1.msra.mxu0 0.0
    %54 = vmatprep.subr.mxu0 0.0
    %55 = vmatpush1.msra.mxu0 0.0
    %56 = vmatprep.subr.mxu0 0.0
    %57 = vmatpush1.msra.mxu0 0.0
    %58 = vmatprep.subr.mxu0 0.0
    %59 = vmatpush1.msra.mxu0 0.0
    %60 = vmatprep.subr.mxu0 0.0
    %61 = vmatpush1.msra.mxu0 0.0
    %62 = vmatprep.subr.mxu0 0.0
    %63 = vmatpush1.msra.mxu0 0.0
    %64 = vmatprep.subr.mxu0 0.0
    %65 = vmatpush1.msra.mxu0 0.0
    %66 = vmatprep.subr.mxu0 0.0
    %67 = vmatpush1.msra.mxu0 0.0
    %68 = vmatprep.subr.mxu0 0.0
    %69 = vmatpush1.msra.mxu0 0.0
    %70 = vmatprep.subr.mxu0 0.0
    %71 = vmatpush1.msra.mxu0 0.0
    %72 = vmatprep.subr.mxu0 0.0
    %73 = vmatpush1.msra.mxu0 0.0
    %74 = vmatprep.subr.mxu0 0.0
    %75 = vmatpush1.msra.mxu0 0.0
    %76 = vmatprep.subr.mxu0 0.0
    %77 = vmatpush1.msra.mxu0 0.0
    %78 = vmatprep.subr.mxu0 0.0
    %79 = vmatpush1.msra.mxu0 0.0
    %80 = vmatprep.subr.mxu0 0.0
    %81 = vmatpush1.msra.mxu0 0.0
    %82 = vmatprep.subr.mxu0 0.0
    %83 = vmatpush1.msra.mxu0 0.0
    %84 = vmatprep.subr.mxu0 0.0
    %85 = vmatpush1.msra.mxu0 0.0
    %86 = vmatprep.subr.mxu0 0.0
    %87 = vmatpush1.msra.mxu0 0.0
    %88 = vmatprep.subr.mxu0 0.0
    %89 = vmatpush1.msra.mxu0 0.0
    %90 = vmatprep.subr.mxu0 0.0
    %91 = vmatpush1.msra.mxu0 0.0
    %92 = vmatprep.subr.mxu0 0.0
    %93 = vmatpush1.msra.mxu0 0.0
    %94 = vmatprep.subr.mxu0 0.0
    %95 = vmatpush1.msra.mxu0 0.0
    %96 = vmatprep.subr.mxu0 0.0
    %97 = vmatpush1.msra.mxu0 0.0
    %98 = vmatprep.subr.mxu0 0.0
    %99 = vmatpush1.msra.mxu0 0.0
    %100 = vmatprep.subr.mxu0 0.0
    %101 = vmatpush1.msra.mxu0 0.0
    %102 = vmatprep.mubr.f32.mxu0 0.0
    %103 = vmatmul.mubr.f32.gmra.mrb[0].mxu0 %v36
    %v104 = vpop.f32.mrb[0].mxu0
    %v105 = vadd.f32 %v32, %v104
    %v106 = vpop.f32.mrb[0].mxu0
    %107 = vdwg.mxu0
    %v108 = vtanh.pop %v105
    %v109 = vld [vmem:[%s3] sm:$0xff]
    %v110 = vld [vmem:[%s3 + $0x8] sm:$0xff]
    %v111 = vld [vmem:[%s3 + $0x10] sm:$0xff]
    %v112 = vld [vmem:[%s3 + $0x18] sm:$0xff]
    %v113 = vld [vmem:[%s4] sm:$0x1]
    %v115 = vlaneseq
    %v116 = vshrl.u32 %v115, 7
    %v117 = vsub.s32 0, %v116
    %v118 = vrot.slane %v113, %v117
    %vm120 = vcmask 261120
    %v122 = vsel %vm120, %v108, 0
    %124 = vmatprep.subr.mxu0 0.0
    %125 = vmatpush1.msra.mxu0 %v109
    %126 = vmatprep.subr.mxu0 0.0
    %127 = vmatpush1.msra.mxu0 %v110
    %128 = vmatprep.subr.mxu0 0.0
    %129 = vmatpush1.msra.mxu0 %v111
    %130 = vmatprep.subr.mxu0 0.0
    %131 = vmatpush1.msra.mxu0 %v112
    %132 = vmatprep.subr.mxu0 0.0
    %133 = vmatpush1.msra.mxu0 0.0
    %134 = vmatprep.subr.mxu0 0.0
    %135 = vmatpush1.msra.mxu0 0.0
    %136 = vmatprep.subr.mxu0 0.0
    %137 = vmatpush1.msra.mxu0 0.0
    %138 = vmatprep.subr.mxu0 0.0
    %139 = vmatpush1.msra.mxu0 0.0
    %140 = vmatprep.subr.mxu0 0.0
    %141 = vmatpush1.msra.mxu0 0.0
    %142 = vmatprep.subr.mxu0 0.0
    %143 = vmatpush1.msra.mxu0 0.0
    %144 = vmatprep.subr.mxu0 0.0
    %145 = vmatpush1.msra.mxu0 0.0
    %146 = vmatprep.subr.mxu0 0.0
    %147 = vmatpush1.msra.mxu0 0.0
    %148 = vmatprep.subr.mxu0 0.0
    %149 = vmatpush1.msra.mxu0 0.0
    %150 = vmatprep.subr.mxu0 0.0
    %151 = vmatpush1.msra.mxu0 0.0
    %152 = vmatprep.subr.mxu0 0.0
    %153 = vmatpush1.msra.mxu0 0.0
    %154 = vmatprep.subr.mxu0 0.0
    %155 = vmatpush1.msra.mxu0 0.0
    %156 = vmatprep.subr.mxu0 0.0
    %157 = vmatpush1.msra.mxu0 0.0
    %158 = vmatprep.subr.mxu0 0.0
    %159 = vmatpush1.msra.mxu0 0.0
    %160 = vmatprep.subr.mxu0 0.0
    %161 = vmatpush1.msra.mxu0 0.0
    %162 = vmatprep.subr.mxu0 0.0
    %163 = vmatpush1.msra.mxu0 0.0
    %164 = vmatprep.subr.mxu0 0.0
    %165 = vmatpush1.msra.mxu0 0.0
    %166 = vmatprep.subr.mxu0 0.0
    %167 = vmatpush1.msra.mxu0 0.0
    %168 = vmatprep.subr.mxu0 0.0
    %169 = vmatpush1.msra.mxu0 0.0
    %170 = vmatprep.subr.mxu0 0.0
    %171 = vmatpush1.msra.mxu0 0.0
    %172 = vmatprep.subr.mxu0 0.0
    %173 = vmatpush1.msra.mxu0 0.0
    %174 = vmatprep.subr.mxu0 0.0
    %175 = vmatpush1.msra.mxu0 0.0
    %176 = vmatprep.subr.mxu0 0.0
    %177 = vmatpush1.msra.mxu0 0.0
    %178 = vmatprep.subr.mxu0 0.0
    %179 = vmatpush1.msra.mxu0 0.0
    %180 = vmatprep.subr.mxu0 0.0
    %181 = vmatpush1.msra.mxu0 0.0
    %182 = vmatprep.subr.mxu0 0.0
    %183 = vmatpush1.msra.mxu0 0.0
    %184 = vmatprep.subr.mxu0 0.0
    %185 = vmatpush1.msra.mxu0 0.0
    %186 = vmatprep.subr.mxu0 0.0
    %187 = vmatpush1.msra.mxu0 0.0
    %188 = vmatprep.mubr.f32.mxu0 0.0
    %189 = vmatmul.mubr.f32.gmra.mrb[0].mxu0 %v122
    %v190 = vpop.f32.mrb[0].mxu0
    %v191 = vadd.f32 %v118, %v190
    %v192 = vpop.f32.mrb[0].mxu0
    %193 = vdwg.mxu0
    %vm194 = vcmask 64512
    %v195 = vsel %vm194, %v191, -inf
    %196 = vmax.xlane.f32.xlu0 %v195
    %v197 = vpop.xlane.xlu0 %196
    %v198 = vsub.f32 %v191, %v197
    %v199 = vmul.f32 %v198, 1.442695
    %v200 = vpow.pop %v199
    %v201 = vsel %vm194, %v200, 0.0
    %202 = vadd.xlane.f32.xlu0 %v201
    %v203 = vpop.xlane.xlu0 %202
    %v204 = vlog2.pop %v203
    %v205 = vmul.f32 %v204, 0.6931472
    %v206 = vld [vmem:[%s5] sm:$0xff]
    %v207 = vlog2.pop %v206
    %v208 = vmul.f32 %v207, 0.6931472
    %v209 = vsub.f32 0.0, %v208
    %v210 = vlog2.pop %v209
    %v211 = vmul.f32 %v210, 0.6931472
    %v212 = vsub.f32 0.0, %v211
    %v213 = vadd.f32 %v191, %v212
    %v214 = vsel %vm194, %v213, -inf
    %215 = vmax.xlane.f32.xlu0 %v214
    %v216 = vpop.xlane.xlu0 %215
    %v217 = vlaneseq
    %v218 = vand.u32 %v217, 127
    %vm219 = vcmp.ge.f32.partialorder %v213, %v216
    %v220 = vsel %vm219, %v218, 8
    %v221 = vsel %vm194, %v220, 2147483647
    %v222 = vand.u32 %v221, 65535
    %v223 = vshra.s32 %v221, 16
    %v224 = vcvt.s32.f32 %v222
    %v225 = vcvt.s32.f32 %v223
    %226 = vmin.xlane.f32.xlu0 %v225
    %v227 = vpop.xlane.xlu0 %226
    %vm228 = vcmp.eq.f32.partialorder %v225, %v227
    %v229 = vsel %vm228, %v224, inf
    %230 = vmin.xlane.f32.xlu0 %v229
    %v231 = vpop.xlane.xlu0 %230
    %v232 = vcvt.f32.s32 %v231
    %v233 = vcvt.f32.s32 %v227
    %v234 = vshll.u32 %v233, 16
    %v235 = vadd.s32 %v234, %v232
    %vm236 = vcmp.eq.s32.totalorder %v218, %v235
    %v237 = vsel %vm236, 1, 0
    %v238 = vcvt.s32.f32 %v237
    %v239 = vmul.f32 %v198, %v238
    %v240 = vsel %vm194, %v239, 0.0
    %241 = vadd.xlane.f32.xlu0 %v240
    %v242 = vpop.xlane.xlu0 %241
    %v243 = vsub.f32 %v242, %v205
    %v244 = vcvt.s32.f32 %v235
    %vm245 = vcmp.eq.s32.totalorder %v218, 0
    %vm246 = vcmp.eq.s32.totalorder %v218, 1
    %vm247 = vcmp.eq.s32.totalorder %v218, 2
    %v248 = vsel %vm247, %v244, 0.0
    %250 = vset.pattern.permute.xlu0 8
    %251 = vperm.xlu0 %250, %v191
    %v252 = vpop.permute.xlu0 %251
    %v254 = vsel %vm246, %v252, %v248
    %v255 = vsel %vm245, %v243, %v254
    %256 = vst [vmem:[#allocation2] sm:$0xff] %v255
    // Predicated region
    $region26: #{tpu_custom_call.1} parent=1 // pred_check
      _
    $region27: #{tpu_custom_call.1} parent=1 // pred_check_branch
      %258 = sbr.rel (0) target = $region29
    $region28: #{tpu_custom_call.1} parent=1 // pred_region
      %s260 = ssub.s32 128, 128
      %261 = vsyncadd [#allocation3], %s260
      %s263 = sshll.u32 [#allocation2], 4
      %s264 = int_to_ptr.vmem [resolvable:$true] %s263
      %266 = dma.vmem_to_hbm [thread:$0]  %s264, 128, %s6, [#allocation3]
    $region29: #{tpu_custom_call.1} parent=1 // pred_fallthru
      _
    // Predicated region
    $region30: #{tpu_custom_call.1} parent=1 // pred_check
      _
    $region31: #{tpu_custom_call.1} parent=1 // pred_check_branch
      %268 = sbr.rel (0) target = $region33
    $region32: #{tpu_custom_call.1} parent=1 // pred_region
      %269 = dma.done [#allocation3], 128
    $region33: #{tpu_custom_call.1} parent=1 // pred_fallthru
      _
    %270 = vsyncpa [#allocation3], 1

</llo_original>
